<compile_context>
chip_gen: v5e
topology: v5e:2x2
jax: 0.10.0
libtpu: 0.0.40
codegen_flags: <defaults>
</compile_context>

<pallas_src>
import jax
import jax.numpy as jnp
from jax.experimental import pallas as pl
from jax.experimental.pallas import tpu as pltpu


# Below this many rows a fused XLA matmul beats any custom call (the
# pad/transpose plumbing + ~0.35 us/step pallas_call overhead dominate).
_SMALL_BATCH_FALLBACK_ROWS = 16384


def _round_up(a: int, m: int) -> int:
    return ((a + m - 1) // m) * m


def _cdiv(a: int, m: int) -> int:
    return -(-a // m)


def _default_row_tile() -> int:
    """512-row tiles (16 MiB double-buffered at c=1024) fit the 32 MiB default
    scoped VMEM on v6e/v7x; v5e's default is 16 MiB, so stay at 256 there."""
    try:
        kind = jax.devices()[0].device_kind.lower()
    except Exception:
        return 256
    return 256 if "v5" in kind else 512


def _mv_linear_kernel(w_ref, b_ref, x_ref, o_ref):
    """w_ref: (in_f,) SMEM, b_ref: (1,) SMEM,
    x_ref: (in_f, TILE_R, C) VMEM feature planes, o_ref: (TILE_R, C) VMEM."""
    in_f = x_ref.shape[0]
    acc = x_ref[0] * w_ref[0]              # VPU scalar * vector (no MXU)
    for f in range(1, in_f):               # static unroll over 3 features
        acc = acc + x_ref[f] * w_ref[f]
    o_ref[...] = (acc + b_ref[0]).astype(o_ref.dtype)


def multivariate_linear_forward(x, w, b, *, lane_tile=1024, row_tile=None,
                                force_pallas=False):
    """x: (N, 3), w: (1, 3), b: (1,)  ->  (N, 1) float32."""
    n, in_f = x.shape
    out_f, w_in_f = w.shape
    assert w_in_f == in_f and out_f == 1

    xf = x if x.dtype == jnp.float32 else x.astype(jnp.float32)
    wf = w if w.dtype == jnp.float32 else w.astype(jnp.float32)
    bf = b if b.dtype == jnp.float32 else b.astype(jnp.float32)

    # Small-batch fallback: a fused XLA op reads x once and writes y once.
    if not force_pallas and n < _SMALL_BATCH_FALLBACK_ROWS:
        return jnp.dot(xf, wf.T) + bf

    if row_tile is None:
        row_tile = _default_row_tile()

    # Lane-dense slab sizing: C multiple of 128, row tile multiple of 8,
    # slab rows R an exact multiple of the row tile (no ragged blocks).
    c = min(lane_tile, _round_up(max(n, 1), 128))
    rows = _cdiv(n, c)
    rows8 = _round_up(rows, 8)
    nsteps = _cdiv(rows8, row_tile)
    if rows8 >= 16:
        # Keep >= 2 grid steps so "parallel" can shard across v7x's 2 TCs.
        nsteps = max(nsteps, 2)
    # Balance rows across steps: caps padded-row DMA waste at <8 rows/step
    # instead of up to a full (row_tile - 8)-row tile.
    tr = _round_up(_cdiv(rows8, nsteps), 8)
    r = _round_up(rows8, tr)
    n_pad = r * c

    # Layout plumbing in plain XLA. Transpose *before* padding so we never
    # transpose padded zeros; padded rows evaluate to b and are sliced off.
    x_planes = jnp.pad(xf.T, ((0, 0), (0, n_pad - n))).reshape(in_f, r, c)

    grid = (r // tr,)
    y2d = pl.pallas_call(
        _mv_linear_kernel,
        out_shape=jax.ShapeDtypeStruct((r, c), jnp.float32),
        grid=grid,
        in_specs=[
            pl.BlockSpec(memory_space=pltpu.MemorySpace.SMEM),   # w (in_f,)
            pl.BlockSpec(memory_space=pltpu.MemorySpace.SMEM),   # b (1,)
            pl.BlockSpec((in_f, tr, c), lambda i: (0, i, 0)),    # x planes
        ],
        out_specs=pl.BlockSpec((tr, c), lambda i: (i, 0)),
        compiler_params=pltpu.CompilerParams(
            dimension_semantics=("parallel",),
        ),
    )(wf.reshape(in_f), bf, x_planes)

    y_flat = y2d.reshape(n_pad)
    if n != n_pad:
        y_flat = y_flat[:n]          # skip the slice copy when slab-aligned
    return y_flat.reshape(n, out_f)


if __name__ == "__main__":
    key = jax.random.PRNGKey(0)
    kx, kw, kb, kx2 = jax.random.split(key, 4)

    # Small shapes consistent with nn.Linear(3, 1): batch=8, features=3.
    n, in_f = 8, 3
    x = jax.random.normal(kx, (n, in_f), dtype=jnp.float32)

    # PyTorch default init: U(-1/sqrt(fan_in), 1/sqrt(fan_in)).
    bound = 1.0 / (in_f ** 0.5)
    w = jax.random.uniform(kw, (1, in_f), dtype=jnp.float32,
                           minval=-bound, maxval=bound)
    b = jax.random.uniform(kb, (1,), dtype=jnp.float32,
                           minval=-bound, maxval=bound)

    y_ref = x @ w.T + b

    # 1) Default path at small batch -> plain-XLA fallback (per perf review).
    y_fb = jax.block_until_ready(multivariate_linear_forward(x, w, b))
    assert y_fb.shape == (n, 1)
    assert jnp.allclose(y_fb, y_ref, atol=1e-5, rtol=1e-5)

    # 2) Pallas kernel explicitly exercised at the same small shape.
    y_pl = jax.block_until_ready(
        multivariate_linear_forward(x, w, b, force_pallas=True))
    assert y_pl.shape == (n, 1)
    assert jnp.allclose(y_pl, y_ref, atol=1e-5, rtol=1e-5)

    # 3) Pallas kernel on a batch not aligned to any tile size (padding path).
    n2 = 300
    x2 = jax.random.normal(kx2, (n2, in_f), dtype=jnp.float32)
    y2 = jax.block_until_ready(
        multivariate_linear_forward(x2, w, b, force_pallas=True))
    assert y2.shape == (n2, 1)
    assert jnp.allclose(y2, x2 @ w.T + b, atol=1e-5, rtol=1e-5)

    print("KERNEL_OK")
</pallas_src>

<mosaic_0001>
module attributes {stable_mosaic.version = 11 : i64} {
  func.func @_mv_linear_kernel(%arg0: i32, %arg1: memref<3xf32, #tpu.memory_space<smem>>, %arg2: memref<1xf32, #tpu.memory_space<smem>>, %arg3: memref<3x8x128xf32, #tpu.memory_space<vmem>>, %arg4: memref<8x128xf32, #tpu.memory_space<vmem>>) attributes {dimension_semantics = [#tpu.dimension_semantics<parallel>], iteration_bounds = array<i64: 1>, scalar_prefetch = 0 : i64, scratch_operands = 0 : i64, tpu.core_type = #tpu.core_type<tc>, window_params = [{transform_indices = @transform_0, window_bounds = array<i64: 3>}, {transform_indices = @transform_1, window_bounds = array<i64: 1>}, {transform_indices = @transform_2, window_bounds = array<i64: 3, 8, 128>}, {transform_indices = @transform_3, window_bounds = array<i64: 8, 128>}]} {
    %c0 = arith.constant 0 : index
    %c0_0 = arith.constant 0 : index
    %c0_1 = arith.constant 0 : index
    %0 = vector.load %arg3[%c0, %c0_0, %c0_1] : memref<3x8x128xf32, #tpu.memory_space<vmem>>, vector<1x8x128xf32>
    %1 = vector.shape_cast %0 : vector<1x8x128xf32> to vector<8x128xf32>
    %c0_2 = arith.constant 0 : index
    %2 = memref.load %arg1[%c0_2] : memref<3xf32, #tpu.memory_space<smem>>
    %3 = vector.broadcast %2 : f32 to vector<8x128xf32>
    %4 = arith.mulf %1, %3 : vector<8x128xf32>
    %c1 = arith.constant 1 : index
    %c0_3 = arith.constant 0 : index
    %c0_4 = arith.constant 0 : index
    %5 = vector.load %arg3[%c1, %c0_3, %c0_4] : memref<3x8x128xf32, #tpu.memory_space<vmem>>, vector<1x8x128xf32>
    %6 = vector.shape_cast %5 : vector<1x8x128xf32> to vector<8x128xf32>
    %c1_5 = arith.constant 1 : index
    %7 = memref.load %arg1[%c1_5] : memref<3xf32, #tpu.memory_space<smem>>
    %8 = vector.broadcast %7 : f32 to vector<8x128xf32>
    %9 = arith.mulf %6, %8 : vector<8x128xf32>
    %10 = arith.addf %4, %9 : vector<8x128xf32>
    %c2 = arith.constant 2 : index
    %c0_6 = arith.constant 0 : index
    %c0_7 = arith.constant 0 : index
    %11 = vector.load %arg3[%c2, %c0_6, %c0_7] : memref<3x8x128xf32, #tpu.memory_space<vmem>>, vector<1x8x128xf32>
    %12 = vector.shape_cast %11 : vector<1x8x128xf32> to vector<8x128xf32>
    %c2_8 = arith.constant 2 : index
    %13 = memref.load %arg1[%c2_8] : memref<3xf32, #tpu.memory_space<smem>>
    %14 = vector.broadcast %13 : f32 to vector<8x128xf32>
    %15 = arith.mulf %12, %14 : vector<8x128xf32>
    %16 = arith.addf %10, %15 : vector<8x128xf32>
    %c0_9 = arith.constant 0 : index
    %17 = memref.load %arg2[%c0_9] : memref<1xf32, #tpu.memory_space<smem>>
    %18 = vector.broadcast %17 : f32 to vector<8x128xf32>
    %19 = arith.addf %16, %18 : vector<8x128xf32>
    %c0_10 = arith.constant 0 : index
    %c0_11 = arith.constant 0 : index
    %20 = vector.load %arg4[%c0_10, %c0_11] : memref<8x128xf32, #tpu.memory_space<vmem>>, vector<8x128xf32>
    tpu.vector_store %arg4[%c0_10, %c0_11], %19 {strides = array<i32>} : memref<8x128xf32, #tpu.memory_space<vmem>>, vector<8x128xf32>,
    return
  }
  func.func @transform_0(%arg0: i32) -> i32 {
    %c0_i32 = arith.constant 0 : i32
    %c0_i32_0 = arith.constant 0 : i32
    return %c0_i32 : i32
  }
  func.func @transform_1(%arg0: i32) -> i32 {
    %c0_i32 = arith.constant 0 : i32
    %c0_i32_0 = arith.constant 0 : i32
    return %c0_i32 : i32
  }
  func.func @transform_2(%arg0: i32) -> (i32, i32, i32) {
    %c0_i32 = arith.constant 0 : i32
    %c0_i32_0 = arith.constant 0 : i32
    %c0_i32_1 = arith.constant 0 : i32
    return %c0_i32, %arg0, %c0_i32_0 : i32, i32, i32
  }
  func.func @transform_3(%arg0: i32) -> (i32, i32) {
    %c0_i32 = arith.constant 0 : i32
    %c0_i32_0 = arith.constant 0 : i32
    return %arg0, %c0_i32 : i32, i32
  }
}

</mosaic_0001>

<llo_original>
// kernel: tpu_custom_call.1
$region0: #{tpu_custom_call.1}
  #allocation0 [shape = 'u32[]', space=smem, size = 0x4, offset = 0x4, fixed_abs, tag = 'smem constant byte address 0x4 - core index']
  #allocation1 [shape = 'u32[72,128]{1,0:T(1,128)}', space=vmem, size = 0x9000, scoped, tag = 'internal scratch']
  #allocation2 [shape = 'f32[1]{0:T(128)S(6)}', space=smem, size = 0x200, scoped, tag = 'scoped memory for tpu_custom_call.1']
  %s0 = inlined_call_operand.vmem [shape: f32[3], index: 0, kind: input, shape index: {}]
  %s1 = inlined_call_operand.<no memory space> [shape: f32[1], index: 1, kind: input, shape index: {}]
  %s2 = inlined_call_operand.hbm [shape: f32[3,8,128], index: 2, kind: input, shape index: {}]
  %s3 = inlined_call_operand.hbm [shape: f32[8,128], index: 3, kind: output, shape index: {}]
  %s4 = sld [smem:[#allocation0]]
  $region30: #{tpu_custom_call.1} parent=0
    _
  %s6 = ssub.s32 1, %s4
  %s7 = scalar_select 0, %s6, %s4
  %8 = sst [smem:[#allocation2]] %s1
  $region1: #{tpu_custom_call.1} parent=0
    #allocation3 [shape = 'u8[512]{0}', space=smem, size = 0x200, scoped, tag = 'input window, operand 0, single buffered']
    #allocation4 [shape = 's32[1]{0}', space=sflag, size = 0x4, scoped, tag = 'scoped memory for tpu_custom_call.1']
    #allocation5 [shape = 's32[1]{0}', space=sflag, size = 0x4, scoped, tag = 'scoped memory for tpu_custom_call.1']
    #allocation6 [shape = 's32[1]{0}', space=sflag, size = 0x4, scoped, tag = 'scoped memory for tpu_custom_call.1']
    #allocation7 [shape = 'u8[12288]{0}', space=vmem, size = 0x3000, scoped, tag = 'input window, operand 2, single buffered']
    #allocation8 [shape = 'u8[4096]{0}', space=vmem, size = 0x1000, scoped, tag = 'output window, operand 0, single buffered']
    %9 = vsyncpa [#allocation6], 0
    %10 = vsyncpa [#allocation4], 0
    %11 = vsyncpa [#allocation5], 0
    // Predicated region
    $region2: #{tpu_custom_call.1} parent=1 // pred_check
      _
    $region3: #{tpu_custom_call.1} parent=1 // pred_check_branch
      %13 = sbr.rel (0) target = $region5
    $region4: #{tpu_custom_call.1} parent=1 // pred_region
      %15 = vsyncadd [#allocation6], 0
      %s17 = sshll.u32 %s0, 4
      %s18 = int_to_ptr.vmem [resolvable:$true] %s17
      %20 = dma.vmem_to_smem %s18, 16, [#allocation3], [#allocation6]
    $region5: #{tpu_custom_call.1} parent=1 // pred_fallthru
      _
    // Predicated region
    $region6: #{tpu_custom_call.1} parent=1 // pred_check
      _
    $region7: #{tpu_custom_call.1} parent=1 // pred_check_branch
      %22 = sbr.rel (0) target = $region9
    $region8: #{tpu_custom_call.1} parent=1 // pred_region
      _
    $region9: #{tpu_custom_call.1} parent=1 // pred_fallthru
      _
    // Predicated region
    $region10: #{tpu_custom_call.1} parent=1 // pred_check
      _
    $region11: #{tpu_custom_call.1} parent=1 // pred_check_branch
      %24 = sbr.rel (0) target = $region13
    $region12: #{tpu_custom_call.1} parent=1 // pred_region
      %26 = vsyncadd [#allocation4], 0
      %s27 = sshll.u32 %s2, 4
      %s28 = int_to_ptr.hbm [resolvable:$true] %s27
      %s29 = sshll.u32 [#allocation7], 4
      %s30 = int_to_ptr.vmem [resolvable:$true] %s29
      %35 = dma.hbm_to_vmem [thread:$0]  %s28, 384, %s30, [#allocation4], 128, 128, 8
    $region13: #{tpu_custom_call.1} parent=1 // pred_fallthru
      _
    // Predicated region
    $region14: #{tpu_custom_call.1} parent=1 // pred_check
      _
    $region15: #{tpu_custom_call.1} parent=1 // pred_check_branch
      %37 = sbr.rel (0) target = $region17
    $region16: #{tpu_custom_call.1} parent=1 // pred_region
      %39 = dma.done [#allocation6], 16
    $region17: #{tpu_custom_call.1} parent=1 // pred_fallthru
      _
    // Predicated region
    $region18: #{tpu_custom_call.1} parent=1 // pred_check
      _
    $region19: #{tpu_custom_call.1} parent=1 // pred_check_branch
      %41 = sbr.rel (0) target = $region21
    $region20: #{tpu_custom_call.1} parent=1 // pred_region
      %43 = dma.done [#allocation4], 384
    $region21: #{tpu_custom_call.1} parent=1 // pred_fallthru
      _
    %44 = sfence
    %v45 = vld [vmem:[#allocation7] sm:$0xff]
    %s46 = sld [smem:[#allocation3]]
    %v47 = vstv %s46
    %v48 = vmul.f32 %v45, %v47
    %s49 = scalar_lea.vmem [#allocation7], 8
    %v50 = vld [vmem:[%s49] sm:$0xff]
    %s51 = sld [smem:[#allocation3 + $0x1]]
    %v52 = vstv %s51
    %v53 = vmul.f32 %v50, %v52
    %v54 = vadd.f32 %v48, %v53
    %s55 = scalar_lea.vmem [#allocation7], 16
    %v56 = vld [vmem:[%s55] sm:$0xff]
    %s57 = sld [smem:[#allocation3 + $0x2]]
    %v58 = vstv %s57
    %v59 = vmul.f32 %v56, %v58
    %v60 = vadd.f32 %v54, %v59
    %s61 = sld [smem:[#allocation2]]
    %v62 = vstv %s61
    %v63 = vadd.f32 %v60, %v62
    %64 = vst [vmem:[#allocation8] sm:$0xff] %v63
    // Predicated region
    $region22: #{tpu_custom_call.1} parent=1 // pred_check
      _
    $region23: #{tpu_custom_call.1} parent=1 // pred_check_branch
      %66 = sbr.rel (0) target = $region25
    $region24: #{tpu_custom_call.1} parent=1 // pred_region
      %68 = vsyncadd [#allocation5], 0
      %s70 = sshll.u32 [#allocation8], 4
      %s71 = int_to_ptr.vmem [resolvable:$true] %s70
      %s72 = sshll.u32 %s3, 4
      %s73 = int_to_ptr.hbm [resolvable:$true] %s72
      %75 = dma.vmem_to_hbm [thread:$0]  %s71, 128, %s73, [#allocation5]
    $region25: #{tpu_custom_call.1} parent=1 // pred_fallthru
      _
    // Predicated region
    $region26: #{tpu_custom_call.1} parent=1 // pred_check
      _
    $region27: #{tpu_custom_call.1} parent=1 // pred_check_branch
      %77 = sbr.rel (0) target = $region29
    $region28: #{tpu_custom_call.1} parent=1 // pred_region
      %79 = dma.done [#allocation5], 128
    $region29: #{tpu_custom_call.1} parent=1 // pred_fallthru
      _
    %80 = vsyncpa [#allocation4], 1
    %81 = vsyncpa [#allocation5], 1
    %82 = vsyncpa [#allocation6], 1

</llo_original>
